<compile_context>
chip_gen: v7x
topology: tpu7x:2x2x1
jax: 0.10.0
libtpu: 0.0.40
codegen_flags: <defaults>
</compile_context>

<pallas_src>
import functools

import jax
import jax.numpy as jnp
from jax.experimental import pallas as pl
from jax.experimental.pallas import tpu as pltpu

_LANES = 512            # lane-dense last dim (multiple of 128)
_TILE_R = 1024          # rows per tile -> (1024, 512) f32 = 2 MiB per input tile
_SMALL_N = 1 << 20      # below this, use the single-block (un-gridded) path
_VMEM_LIMIT = 32 * 1024 * 1024


def _sigmoid_mse_single_kernel(x_ref, y_ref, o_ref, *, n, inv_n):
    """Whole (small, lane-dense) array in one VMEM block; scalar SMEM output."""
    x = x_ref[...].astype(jnp.float32)
    y = y_ref[...].astype(jnp.float32)
    d = jax.nn.sigmoid(x) - y
    rows, lanes = x_ref.shape
    row = jax.lax.broadcasted_iota(jnp.int32, (rows, 1), 0)
    lane = jax.lax.broadcasted_iota(jnp.int32, (1, lanes), 1)
    flat = row * lanes + lane
    d2 = jnp.where(flat < n, d * d, 0.0)     # select (not mul): NaN-safe on pads
    o_ref[0, 0] = jnp.sum(d2) * inv_n


def _sigmoid_mse_tiled_kernel(x_ref, y_ref, o_ref, acc_ref, *,
                              n, tiles_per_core, inv_n):
    """Streaming (TILE_R, LANES) tiles; (1, LANES) running accumulator per core."""
    c = pl.program_id(0)            # core-parallel axis
    i = pl.program_id(1)            # sequential reduction axis

    @pl.when(i == 0)
    def _init():
        acc_ref[...] = jnp.zeros_like(acc_ref)

    x = x_ref[...].astype(jnp.float32)
    y = y_ref[...].astype(jnp.float32)
    d = jax.nn.sigmoid(x) - y                       # EUP sigmoid + VPU subtract

    # Mask everything at/after the true element count N: covers the ragged last
    # tile (Pallas edge-block garbage) and any clamped duplicate tile on the
    # last core when the tile count is odd.
    t = c * tiles_per_core + i                      # global (unclamped) tile idx
    base = t * (_TILE_R * _LANES)
    row = jax.lax.broadcasted_iota(jnp.int32, (_TILE_R, 1), 0)
    lane = jax.lax.broadcasted_iota(jnp.int32, (1, _LANES), 1)
    flat = base + row * _LANES + lane
    d2 = jnp.where(flat < n, d * d, 0.0)            # select: NaN-safe

    # Sublane reduce (idle XLU) into a tiny per-lane accumulator.
    acc_ref[...] += jnp.sum(d2, axis=0, keepdims=True)

    @pl.when(i == pl.num_programs(1) - 1)
    def _finalize():
        o_ref[...] = (acc_ref[...] * inv_n).reshape(o_ref.shape)


def _as_lane_rows(x, y, n):
    """Present flat (x, y) as (rows, _LANES); zero-copy when n % _LANES == 0."""
    rem = n % _LANES
    if rem:
        pad = _LANES - rem
        # Pad values are irrelevant: the kernels mask flat index >= n.
        x = jnp.pad(x, (0, pad))
        y = jnp.pad(y, (0, pad))
    rows = (n + _LANES - 1) // _LANES
    return x.reshape(rows, _LANES), y.reshape(rows, _LANES), rows


def _mse_small(x, y, n):
    x2, y2, _ = _as_lane_rows(x, y, n)
    kernel = functools.partial(_sigmoid_mse_single_kernel, n=n, inv_n=1.0 / n)
    out = pl.pallas_call(
        kernel,
        out_shape=jax.ShapeDtypeStruct((1, 1), jnp.float32),
        in_specs=[
            pl.BlockSpec(x2.shape, lambda: (0, 0)),
            pl.BlockSpec(y2.shape, lambda: (0, 0)),
        ],
        out_specs=pl.BlockSpec(memory_space=pltpu.SMEM),
        compiler_params=pltpu.CompilerParams(vmem_limit_bytes=_VMEM_LIMIT),
    )(x2, y2)
    return out[0, 0]


def _mse_tiled(x, y, n):
    x2, y2, rows = _as_lane_rows(x, y, n)
    num_tiles = pl.cdiv(rows, _TILE_R)
    nc = 2 if num_tiles >= 2 else 1          # per-core split; no-op on 1-TC chips
    tpc = pl.cdiv(num_tiles, nc)

    # Clamp so a possible extra step on the last core re-reads an in-bounds tile
    # (its rows are masked out in-kernel, so it contributes exactly zero).
    def in_map(c, i):
        return (jnp.minimum(c * tpc + i, num_tiles - 1), 0)

    kernel = functools.partial(_sigmoid_mse_tiled_kernel,
                               n=n, tiles_per_core=tpc, inv_n=1.0 / n)
    partials = pl.pallas_call(
        kernel,
        out_shape=jax.ShapeDtypeStruct((nc, 1, _LANES), jnp.float32),
        grid=(nc, tpc),
        in_specs=[
            pl.BlockSpec((_TILE_R, _LANES), in_map),
            pl.BlockSpec((_TILE_R, _LANES), in_map),
        ],
        out_specs=pl.BlockSpec((1, 1, _LANES), lambda c, i: (c, 0, 0)),
        scratch_shapes=[pltpu.VMEM((1, _LANES), jnp.float32)],
        compiler_params=pltpu.CompilerParams(
            dimension_semantics=("parallel", "arbitrary"),
            vmem_limit_bytes=_VMEM_LIMIT,
        ),
    )(x2, y2)
    # Per-core, per-lane partials (already scaled by 1/N): tiny final reduce.
    return jnp.sum(partials)


def mse_loss(logits, labels, examples_per_group: int = 1):
    """Equivalent of MSELoss(examples_per_group).forward(logits, labels)."""
    assert logits.size == labels.size
    assert logits.size % examples_per_group == 0
    # The group view is irrelevant to a full-array mean; flatten and present a
    # lane-dense slab instead of (num_groups, examples_per_group).
    x = logits.reshape(-1)
    y = labels.reshape(-1)
    n = x.size
    if n <= _SMALL_N:
        return _mse_small(x, y, n)
    return _mse_tiled(x, y, n)


if __name__ == "__main__":
    key = jax.random.PRNGKey(0)
    k1, k2, k3, k4 = jax.random.split(key, 4)

    # --- small shape consistent with the module: 8 groups x 4 examples/group ---
    examples_per_group = 4
    num_groups = 8
    n_small = num_groups * examples_per_group
    logits_s = jax.random.normal(k1, (n_small,), dtype=jnp.float32)
    labels_s = jax.random.uniform(k2, (n_small,), dtype=jnp.float32)

    loss_s = jax.block_until_ready(
        mse_loss(logits_s, labels_s, examples_per_group=examples_per_group)
    )
    ref_s = jnp.mean(
        (jax.nn.sigmoid(logits_s).reshape(-1, examples_per_group)
         - labels_s.reshape(-1, examples_per_group)) ** 2
    )
    assert jnp.allclose(loss_s, ref_s, rtol=1e-5, atol=1e-6), (loss_s, ref_s)

    # --- ragged, odd-tile-count input: exercises the tiled path, in-kernel tail
    # masking, the 2-"core" parallel axis, and the clamped duplicate tile ---
    n_large = 2 * _TILE_R * _LANES + 777          # > _SMALL_N, not lane-aligned
    logits_l = jax.random.normal(k3, (n_large,), dtype=jnp.float32)
    labels_l = jax.random.uniform(k4, (n_large,), dtype=jnp.float32)

    loss_l = jax.block_until_ready(
        mse_loss(logits_l, labels_l, examples_per_group=1)
    )
    ref_l = jnp.mean((jax.nn.sigmoid(logits_l) - labels_l) ** 2)
    assert jnp.allclose(loss_l, ref_l, rtol=2e-5, atol=1e-6), (loss_l, ref_l)

    print("KERNEL_OK")
</pallas_src>

<mosaic_0001>
module attributes {stable_mosaic.version = 11 : i64} {
  func.func @_sigmoid_mse_single_kernel(%arg0: memref<1x512xf32, #tpu.memory_space<vmem>>, %arg1: memref<1x512xf32, #tpu.memory_space<vmem>>, %arg2: memref<1x1xf32, #tpu.memory_space<smem>>) attributes {dimension_semantics = [], scalar_prefetch = 0 : i64, scratch_operands = 0 : i64, tpu.core_type = #tpu.core_type<tc>} {
    %c0 = arith.constant 0 : index
    %c0_0 = arith.constant 0 : index
    %0 = vector.load %arg0[%c0, %c0_0] : memref<1x512xf32, #tpu.memory_space<vmem>>, vector<1x512xf32>
    %c0_1 = arith.constant 0 : index
    %c0_2 = arith.constant 0 : index
    %1 = vector.load %arg1[%c0_1, %c0_2] : memref<1x512xf32, #tpu.memory_space<vmem>>, vector<1x512xf32>
    %2 = arith.negf %0 : vector<1x512xf32>
    %3 = math.exp %2 : vector<1x512xf32>
    %cst = arith.constant 1.000000e+00 : f32
    %4 = vector.broadcast %cst : f32 to vector<1x512xf32>
    %5 = arith.addf %4, %3 : vector<1x512xf32>
    %6 = arith.divf %4, %5 : vector<1x512xf32>
    %7 = arith.subf %6, %1 : vector<1x512xf32>
    %8 = tpu.iota {dimensions = array<i32: 0>} : vector<1x1xi32>
    %9 = tpu.iota {dimensions = array<i32: 1>} : vector<1x512xi32>
    %c512_i32 = arith.constant 512 : i32
    %10 = vector.broadcast %c512_i32 : i32 to vector<1x1xi32>
    %11 = arith.muli %8, %10 : vector<1x1xi32>
    %12 = vector.broadcast %11 : vector<1x1xi32> to vector<1x512xi32>
    %13 = arith.addi %12, %9 : vector<1x512xi32>
    %c32_i32 = arith.constant 32 : i32
    %14 = vector.broadcast %c32_i32 : i32 to vector<1x512xi32>
    %15 = arith.cmpi slt, %13, %14 : vector<1x512xi32>
    %16 = arith.mulf %7, %7 : vector<1x512xf32>
    %cst_3 = arith.constant 0.000000e+00 : f32
    %17 = vector.broadcast %cst_3 : f32 to vector<1x512xf32>
    %18 = arith.select %15, %16, %17 : vector<1x512xi1>, vector<1x512xf32>
    %19 = vector.shape_cast %18 : vector<1x512xf32> to vector<1x1x512xf32>
    %cst_4 = arith.constant dense<0.000000e+00> : vector<1xf32>
    %20 = vector.multi_reduction <add>, %19, %cst_4 [1, 2] : vector<1x1x512xf32> to vector<1xf32>
    %21 = vector.shape_cast %20 : vector<1xf32> to vector<1x1x1xf32>
    %22 = vector.extract %21[0, 0, 0] : f32 from vector<1x1x1xf32>
    %cst_5 = arith.constant 3.125000e-02 : f32
    %23 = arith.mulf %22, %cst_5 : f32
    %c0_6 = arith.constant 0 : index
    %c0_7 = arith.constant 0 : index
    %24 = memref.load %arg2[%c0_6, %c0_7] : memref<1x1xf32, #tpu.memory_space<smem>>
    memref.store %23, %arg2[%c0_6, %c0_7] : memref<1x1xf32, #tpu.memory_space<smem>>
    return
  }
}

</mosaic_0001>

<llo_original>
// kernel: tpu_custom_call.1
$region0: #{tpu_custom_call.1}
  #allocation0 [shape = 'u32[]', space=smem, size = 0x4, offset = 0x4, fixed_abs, tag = 'smem constant byte address 0x4 - core index']
  #allocation1 [shape = 'u32[144,128]{1,0:T(1,128)}', space=vmem, size = 0x12000, scoped, tag = 'internal scratch']
  %s0 = inlined_call_operand.hbm [shape: f32[1,512], index: 0, kind: input, shape index: {}]
  %s1 = inlined_call_operand.hbm [shape: f32[1,512], index: 1, kind: input, shape index: {}]
  %s2 = inlined_call_operand.hbm [shape: f32[1,1], index: 2, kind: output, shape index: {}]
  %s3 = sld [smem:[#allocation0]]
  $region26: #{tpu_custom_call.1} parent=0
    _
  %s5 = ssub.s32 1, %s3
  %s6 = scalar_select 0, %s5, %s3
  $region1: #{tpu_custom_call.1} parent=0
    #allocation2 [shape = 'u8[2048]{0}', space=vmem, size = 0x800, scoped, tag = 'input window, operand 0, single buffered']
    #allocation3 [shape = 's32[1]{0}', space=sflag, size = 0x4, scoped, tag = 'scoped memory for tpu_custom_call.1']
    #allocation4 [shape = 's32[1]{0}', space=sflag, size = 0x4, scoped, tag = 'scoped memory for tpu_custom_call.1']
    #allocation5 [shape = 'u8[2048]{0}', space=vmem, size = 0x800, scoped, tag = 'input window, operand 1, single buffered']
    #allocation6 [shape = 's32[1]{0}', space=sflag, size = 0x4, scoped, tag = 'scoped memory for tpu_custom_call.1']
    #allocation7 [shape = 'u8[512]{0}', space=smem, size = 0x200, scoped, tag = 'output window, operand 0, single buffered']
    %7 = vsyncpa [#allocation3], 0
    %8 = vsyncpa [#allocation6], 0
    %9 = vsyncpa [#allocation4], 0
    // Predicated region
    $region2: #{tpu_custom_call.1} parent=1 // pred_check
      _
    $region3: #{tpu_custom_call.1} parent=1 // pred_check_branch
      %11 = sbr.rel (0) target = $region5
    $region4: #{tpu_custom_call.1} parent=1 // pred_region
      %s13 = ssub.s32 64, 64
      %14 = vsyncadd [#allocation3], %s13
      %s16 = sshll.u32 [#allocation2], 4
      %s17 = int_to_ptr.vmem [resolvable:$true] %s16
      %19 = dma.hbm_to_vmem [thread:$0]  %s0, 64, %s17, [#allocation3]
    $region5: #{tpu_custom_call.1} parent=1 // pred_fallthru
      _
    // Predicated region
    $region6: #{tpu_custom_call.1} parent=1 // pred_check
      _
    $region7: #{tpu_custom_call.1} parent=1 // pred_check_branch
      %21 = sbr.rel (0) target = $region9
    $region8: #{tpu_custom_call.1} parent=1 // pred_region
      %s23 = ssub.s32 64, 64
      %24 = vsyncadd [#allocation6], %s23
      %s26 = sshll.u32 [#allocation5], 4
      %s27 = int_to_ptr.vmem [resolvable:$true] %s26
      %29 = dma.hbm_to_vmem [thread:$0]  %s1, 64, %s27, [#allocation6]
    $region9: #{tpu_custom_call.1} parent=1 // pred_fallthru
      _
    // Predicated region
    $region10: #{tpu_custom_call.1} parent=1 // pred_check
      _
    $region11: #{tpu_custom_call.1} parent=1 // pred_check_branch
      %31 = sbr.rel (0) target = $region13
    $region12: #{tpu_custom_call.1} parent=1 // pred_region
      %32 = dma.done [#allocation3], 64
    $region13: #{tpu_custom_call.1} parent=1 // pred_fallthru
      _
    // Predicated region
    $region14: #{tpu_custom_call.1} parent=1 // pred_check
      _
    $region15: #{tpu_custom_call.1} parent=1 // pred_check_branch
      %34 = sbr.rel (0) target = $region17
    $region16: #{tpu_custom_call.1} parent=1 // pred_region
      %35 = dma.done [#allocation6], 64
    $region17: #{tpu_custom_call.1} parent=1 // pred_fallthru
      _
    %v36 = vld [vmem:[#allocation2] sm:$0xf]
    %v37 = vld [vmem:[#allocation5] sm:$0xf]
    %v38 = vxor.u32 %v36, 2147483648
    %v39 = vmul.f32 %v38, 1.442695
    %v40 = vpow.pop %v39
    %v41 = vadd.f32 %v40, 1.0
    %v42 = vrcp.pop %v41
    %v43 = vmul.f32 1.0, %v42
    %v44 = vsub.f32 %v43, %v37
    %v45 = vlaneseq
    %v46 = vshrl.u32 %v45, 7
    %v47 = vlaneseq
    %v48 = vand.u32 %v47, 127
    %v49 = vadd.s32 %v48, 128
    %v50 = vadd.s32 %v48, 256
    %v51 = vadd.s32 %v48, 384
    %v52 = vmul.u32 %v46, 512
    %v53 = vadd.s32 %v52, %v48
    %v54 = vadd.s32 %v52, %v49
    %v55 = vadd.s32 %v52, %v50
    %v56 = vadd.s32 %v52, %v51
    %vm57 = vcmp.lt.s32.totalorder %v53, 32
    %vm58 = vcmp.lt.s32.totalorder %v54, 32
    %vm59 = vcmp.lt.s32.totalorder %v55, 32
    %vm60 = vcmp.lt.s32.totalorder %v56, 32
    %v61 = vmul.f32 %v44, %v44
    %v63 = vlaneseq
    %v64 = vshrl.u32 %v63, 7
    %v65 = vsub.s32 0, %v64
    %v66 = vrot.slane %v61, %v65
    %v67 = vlaneseq
    %v68 = vshrl.u32 %v67, 7
    %v69 = vsub.s32 1, %v68
    %v70 = vrot.slane %v61, %v69
    %v71 = vlaneseq
    %v72 = vshrl.u32 %v71, 7
    %v73 = vsub.s32 2, %v72
    %v74 = vrot.slane %v61, %v73
    %v75 = vlaneseq
    %v76 = vshrl.u32 %v75, 7
    %v77 = vsub.s32 3, %v76
    %v78 = vrot.slane %v61, %v77
    %v83 = vsel %vm57, %v66, 0.0
    %v84 = vsel %vm58, %v70, 0.0
    %v85 = vsel %vm59, %v74, 0.0
    %v86 = vsel %vm60, %v78, 0.0
    %vm87 = vcmask 1040384
    %v88 = vsel %vm87, %v83, 0.0
    %v89 = vsel %vm87, %v84, 0.0
    %v90 = vadd.f32 %v88, %v89
    %v91 = vsel %vm87, %v85, 0.0
    %v92 = vadd.f32 %v90, %v91
    %v93 = vsel %vm87, %v86, 0.0
    %v94 = vadd.f32 %v92, %v93
    %95 = vadd.xlane.f32.xlu0 %v94
    %v96 = vpop.xlane.xlu0 %95
    %v97 = vrot.slane %v96, 4
    %v98 = vadd.f32 %v96, %v97
    %v99 = vrot.slane %v98, 2
    %v100 = vadd.f32 %v98, %v99
    %v101 = vrot.slane %v100, 1
    %v102 = vadd.f32 %v100, %v101
    %s103 = vtos %v102
    %s104 = smul.f32 %s103, 0.03125
    %s105 = scalar_lea.smem [#allocation7], 0
    %106 = sst [smem:[%s105]] %s104
    // Predicated region
    $region18: #{tpu_custom_call.1} parent=1 // pred_check
      _
    $region19: #{tpu_custom_call.1} parent=1 // pred_check_branch
      %108 = sbr.rel (0) target = $region21
    $region20: #{tpu_custom_call.1} parent=1 // pred_region
      %s110 = ssub.s32 16, 16
      %111 = vsyncadd [#allocation4], %s110
      %114 = dma.smem_to_hbm [#allocation7], 16, %s2, [#allocation4]
    $region21: #{tpu_custom_call.1} parent=1 // pred_fallthru
      _
    // Predicated region
    $region22: #{tpu_custom_call.1} parent=1 // pred_check
      _
    $region23: #{tpu_custom_call.1} parent=1 // pred_check_branch
      %116 = sbr.rel (0) target = $region25
    $region24: #{tpu_custom_call.1} parent=1 // pred_region
      %117 = dma.done [#allocation4], 16
    $region25: #{tpu_custom_call.1} parent=1 // pred_fallthru
      _
    %118 = sfence
    %119 = vsyncpa [#allocation3], 1
    %120 = vsyncpa [#allocation6], 1
    %121 = vsyncpa [#allocation4], 1

</llo_original>
